<compile_context>
chip_gen: v5e
topology: v5e:2x2
jax: 0.10.0
libtpu: 0.0.40
codegen_flags: <defaults>
</compile_context>

<pallas_src>
import jax
import jax.numpy as jnp
from jax.experimental import pallas as pl
from jax.experimental.pallas import tpu as pltpu


# ---------------------------------------------------------------------------
# Kernel: single grid step, everything packed into lane-dense tiles.
#   x_aug : (B*(C+1), HW)   per-batch channels + a ones-channel (folds b1/emb)
#   x_res : (B*C, HW)       unscaled x for the residual add
#   w1    : (2*B*D, B*(C+1)) block-diag; rows [0:B*D)=uncond, [B*D:)=cond;
#                            c_in, b1 and the conditioning embeddings are
#                            already folded into it.
#   w2    : (B*C, B*D)      block-diag second-layer weights (shared w2^T)
#   b2t   : (B*C, HW)       pre-broadcast second-layer bias
# ---------------------------------------------------------------------------
def cfg_denoiser_kernel(cscale_ref,                     # SMEM scalar
                        x_aug_ref, x_res_ref,           # VMEM tensors
                        w1_ref, w2_ref, b2t_ref,        # VMEM params
                        out_ref):
    s = cscale_ref[0]

    # One MXU op: pre-activations of both CFG branches for all batch elements.
    pre = jnp.dot(w1_ref[...], x_aug_ref[...],
                  preferred_element_type=jnp.float32)    # (2*B*D, HW)

    # One EUP tanh stream over the stacked branches.
    h = jnp.tanh(pre)                                    # (2*B*D, HW)

    # CFG blend in hidden space (exact: second layer is affine in h with
    # branch-invariant bias/residual).  Static, sublane-aligned slices.
    n = h.shape[0] // 2
    h_u = h[:n]                                          # (B*D, HW) uncond
    h_c = h[n:]                                          # (B*D, HW) cond
    h_blend = h_u + (h_c - h_u) * s                      # (B*D, HW)

    # Single blended second-layer matmul (block-diag over batch).
    o = jnp.dot(w2_ref[...], h_blend,
                preferred_element_type=jnp.float32)      # (B*C, HW)

    # Epilogue: two full-lane VPU adds + lane-dense (256-wide) store.
    out_ref[...] = o + b2t_ref[...] + x_res_ref[...]


def _block_diag(blocks):
    """blocks: (nb, m, n) -> (nb*m, nb*n) block-diagonal matrix."""
    nb, m, n = blocks.shape
    out = jnp.zeros((nb * m, nb * n), blocks.dtype)
    for i in range(nb):
        out = out.at[i * m:(i + 1) * m, i * n:(i + 1) * n].set(blocks[i])
    return out


def cfg_denoiser(x_nchw, sigma, uncond, cond, cond_scale, params):
    """x_nchw: (B,C,H,W) f32; sigma: (B,); uncond/cond: (B,D); cond_scale: scalar."""
    w1, b1, w2, b2 = params
    B, C, H, W = x_nchw.shape
    D = w1.shape[1]
    HW = H * W
    Cp1 = C + 1

    # NCHW -> channels-first flat layouts: pure reshapes, no HBM transpose.
    x_cf = x_nchw.reshape(B, C, HW).astype(jnp.float32)
    x_res = x_cf.reshape(B * C, HW)
    x_aug = jnp.concatenate(
        [x_cf, jnp.ones((B, 1, HW), jnp.float32)], axis=1
    ).reshape(B * Cp1, HW)                                   # ones-channel folds biases

    # Tiny parameter re-layouts (a few KB): c_in, b1 and the conditioning
    # embeddings are folded into per-batch, per-branch first-layer weights.
    c_in = jax.lax.rsqrt(sigma.astype(jnp.float32) ** 2 + 1.0)        # (B,)
    w1t = jnp.transpose(w1).astype(jnp.float32)                       # (D, C)
    w1t_b = w1t[None, :, :] * c_in[:, None, None]                     # (B, D, C)
    col_u = (b1.reshape(1, D) + uncond).astype(jnp.float32)[..., None]  # (B, D, 1)
    col_c = (b1.reshape(1, D) + cond).astype(jnp.float32)[..., None]    # (B, D, 1)
    w_aug_u = jnp.concatenate([w1t_b, col_u], axis=2)                 # (B, D, C+1)
    w_aug_c = jnp.concatenate([w1t_b, col_c], axis=2)                 # (B, D, C+1)

    w1_bd = jnp.concatenate(
        [_block_diag(w_aug_u), _block_diag(w_aug_c)], axis=0)         # (2BD, B(C+1))
    w2_bd = _block_diag(
        jnp.broadcast_to(jnp.transpose(w2).astype(jnp.float32)[None],
                         (B, C, D)))                                  # (BC, BD)
    b2t = jnp.broadcast_to(
        b2.reshape(1, C, 1).astype(jnp.float32), (B, C, HW)
    ).reshape(B * C, HW)                                              # (BC, HW)

    cond_scale_arr = jnp.asarray(cond_scale, jnp.float32).reshape(1)

    smem = pl.BlockSpec(memory_space=pltpu.MemorySpace.SMEM)
    vfull = lambda shape: pl.BlockSpec(shape, lambda i: (0,) * len(shape))

    out_flat = pl.pallas_call(
        cfg_denoiser_kernel,
        out_shape=jax.ShapeDtypeStruct((B * C, HW), jnp.float32),
        grid=(1,),                                   # single step: B packed in tile
        in_specs=[
            smem,                                    # cond_scale (1,)
            vfull((B * Cp1, HW)),                    # x_aug
            vfull((B * C, HW)),                      # x residual
            vfull((2 * B * D, B * Cp1)),             # block-diag W1 (both branches)
            vfull((B * C, B * D)),                   # block-diag W2
            vfull((B * C, HW)),                      # b2 pre-broadcast
        ],
        out_specs=vfull((B * C, HW)),
    )(cond_scale_arr, x_aug, x_res, w1_bd, w2_bd, b2t)

    # (B*C, HW) -> NCHW: pure reshape.
    return out_flat.reshape(B, C, H, W)


def cfg_denoiser_reference(x, sigma, uncond, cond, cond_scale, params):
    """Pure-JAX reference mirroring the PyTorch CFGDenoiser.forward."""
    w1, b1, w2, b2 = params

    def inner_model(x_in, sigma_in, cond_in):
        B2, C, H, W = x_in.shape
        xf = jnp.transpose(x_in, (0, 2, 3, 1)).reshape(B2, H * W, C)
        c_in = (1.0 / jnp.sqrt(sigma_in ** 2 + 1.0))[:, None, None]
        h = jnp.tanh(jnp.einsum("bnc,cd->bnd", xf * c_in, w1)
                     + cond_in[:, None, :] + b1)
        of = jnp.einsum("bnd,dc->bnc", h, w2) + b2 + xf
        return jnp.transpose(of.reshape(B2, H, W, C), (0, 3, 1, 2))

    x_in = jnp.concatenate([x] * 2)
    sigma_in = jnp.concatenate([sigma] * 2)
    cond_in = jnp.concatenate([uncond, cond])
    out = inner_model(x_in, sigma_in, cond_in)
    u, c = jnp.split(out, 2)
    return u + (c - u) * cond_scale


if __name__ == "__main__":
    B, C, H, W, D = 2, 4, 16, 16, 32

    key = jax.random.PRNGKey(0)
    kx, ks, ku, kc, k1, k2, k3, k4 = jax.random.split(key, 8)

    x = jax.random.normal(kx, (B, C, H, W), jnp.float32)
    sigma = jax.random.uniform(ks, (B,), jnp.float32, 0.5, 5.0)
    uncond = jax.random.normal(ku, (B, D), jnp.float32)
    cond = jax.random.normal(kc, (B, D), jnp.float32)
    cond_scale = 7.5

    # Deterministic synthetic inner-model parameters.
    # TODO(synk): the real CFGDenoiser wraps an arbitrary inner_model; a full
    # diffusion U-Net has no single-kernel Pallas equivalent, so a small
    # conditioned channel-mixing MLP stands in for it here.
    w1 = jax.random.normal(k1, (C, D), jnp.float32) * 0.2
    b1 = jax.random.normal(k2, (1, D), jnp.float32) * 0.1
    w2 = jax.random.normal(k3, (D, C), jnp.float32) * 0.2
    b2 = jax.random.normal(k4, (1, C), jnp.float32) * 0.1
    params = (w1, b1, w2, b2)

    out = jax.block_until_ready(
        cfg_denoiser(x, sigma, uncond, cond, cond_scale, params))

    ref = cfg_denoiser_reference(x, sigma, uncond, cond, cond_scale, params)
    assert out.shape == (B, C, H, W)
    assert jnp.allclose(out, ref, atol=1e-5, rtol=1e-5)

    print("KERNEL_OK")
</pallas_src>

<mosaic_0001>
module attributes {stable_mosaic.version = 11 : i64} {
  func.func @cfg_denoiser_kernel(%arg0: i32, %arg1: memref<1xf32, #tpu.memory_space<smem>>, %arg2: memref<10x256xf32, #tpu.memory_space<vmem>>, %arg3: memref<8x256xf32, #tpu.memory_space<vmem>>, %arg4: memref<128x10xf32, #tpu.memory_space<vmem>>, %arg5: memref<8x64xf32, #tpu.memory_space<vmem>>, %arg6: memref<8x256xf32, #tpu.memory_space<vmem>>, %arg7: memref<8x256xf32, #tpu.memory_space<vmem>>) attributes {dimension_semantics = [#tpu.dimension_semantics<arbitrary>], iteration_bounds = array<i64: 1>, scalar_prefetch = 0 : i64, scratch_operands = 0 : i64, tpu.core_type = #tpu.core_type<tc>, window_params = [{transform_indices = @transform_0, window_bounds = array<i64: 1>}, {pipeline_mode = #tpu.pipeline_mode<synchronous>, transform_indices = @transform_1, window_bounds = array<i64: 10, 256>}, {pipeline_mode = #tpu.pipeline_mode<synchronous>, transform_indices = @transform_2, window_bounds = array<i64: 8, 256>}, {pipeline_mode = #tpu.pipeline_mode<synchronous>, transform_indices = @transform_3, window_bounds = array<i64: 128, 10>}, {pipeline_mode = #tpu.pipeline_mode<synchronous>, transform_indices = @transform_4, window_bounds = array<i64: 8, 64>}, {pipeline_mode = #tpu.pipeline_mode<synchronous>, transform_indices = @transform_5, window_bounds = array<i64: 8, 256>}, {pipeline_mode = #tpu.pipeline_mode<synchronous>, transform_indices = @transform_6, window_bounds = array<i64: 8, 256>}]} {
    %c0 = arith.constant 0 : index
    %0 = memref.load %arg1[%c0] : memref<1xf32, #tpu.memory_space<smem>>
    %c0_0 = arith.constant 0 : index
    %c0_1 = arith.constant 0 : index
    %1 = vector.load %arg4[%c0_0, %c0_1] : memref<128x10xf32, #tpu.memory_space<vmem>>, vector<128x10xf32>
    %c0_2 = arith.constant 0 : index
    %c0_3 = arith.constant 0 : index
    %2 = vector.load %arg2[%c0_2, %c0_3] : memref<10x256xf32, #tpu.memory_space<vmem>>, vector<10x256xf32>
    %cst = arith.constant dense<0.000000e+00> : vector<128x256xf32>
    %3 = tpu.matmul %1, %2, %cst {dimension_numbers = #tpu.dot_dimension_numbers<[1], [0], [0], [1], [0, 0, 1, 1], [], []>} : vector<128x10xf32>, vector<10x256xf32>, vector<128x256xf32> -> vector<128x256xf32>
    %4 = math.tanh %3 : vector<128x256xf32>
    %5 = vector.extract_strided_slice %4 {offsets = [0, 0], sizes = [64, 256], strides = [1, 1]} : vector<128x256xf32> to vector<64x256xf32>
    %6 = vector.extract_strided_slice %4 {offsets = [64, 0], sizes = [64, 256], strides = [1, 1]} : vector<128x256xf32> to vector<64x256xf32>
    %7 = arith.subf %6, %5 : vector<64x256xf32>
    %8 = vector.broadcast %0 : f32 to vector<64x256xf32>
    %9 = arith.mulf %7, %8 : vector<64x256xf32>
    %10 = arith.addf %5, %9 : vector<64x256xf32>
    %c0_4 = arith.constant 0 : index
    %c0_5 = arith.constant 0 : index
    %11 = vector.load %arg5[%c0_4, %c0_5] : memref<8x64xf32, #tpu.memory_space<vmem>>, vector<8x64xf32>
    %cst_6 = arith.constant dense<0.000000e+00> : vector<8x256xf32>
    %12 = tpu.matmul %11, %10, %cst_6 {dimension_numbers = #tpu.dot_dimension_numbers<[1], [0], [0], [1], [0, 0, 1, 1], [], []>} : vector<8x64xf32>, vector<64x256xf32>, vector<8x256xf32> -> vector<8x256xf32>
    %c0_7 = arith.constant 0 : index
    %c0_8 = arith.constant 0 : index
    %13 = vector.load %arg6[%c0_7, %c0_8] : memref<8x256xf32, #tpu.memory_space<vmem>>, vector<8x256xf32>
    %14 = arith.addf %12, %13 : vector<8x256xf32>
    %c0_9 = arith.constant 0 : index
    %c0_10 = arith.constant 0 : index
    %15 = vector.load %arg3[%c0_9, %c0_10] : memref<8x256xf32, #tpu.memory_space<vmem>>, vector<8x256xf32>
    %16 = arith.addf %14, %15 : vector<8x256xf32>
    %c0_11 = arith.constant 0 : index
    %c0_12 = arith.constant 0 : index
    %17 = vector.load %arg7[%c0_11, %c0_12] : memref<8x256xf32, #tpu.memory_space<vmem>>, vector<8x256xf32>
    tpu.vector_store %arg7[%c0_11, %c0_12], %16 {strides = array<i32>} : memref<8x256xf32, #tpu.memory_space<vmem>>, vector<8x256xf32>,
    return
  }
  func.func @transform_0(%arg0: i32) -> i32 {
    %c0_i32 = arith.constant 0 : i32
    %c0_i32_0 = arith.constant 0 : i32
    return %c0_i32 : i32
  }
  func.func @transform_1(%arg0: i32) -> (i32, i32) {
    %c0_i32 = arith.constant 0 : i32
    %c0_i32_0 = arith.constant 0 : i32
    %c0_i32_1 = arith.constant 0 : i32
    return %c0_i32, %c0_i32_0 : i32, i32
  }
  func.func @transform_2(%arg0: i32) -> (i32, i32) {
    %c0_i32 = arith.constant 0 : i32
    %c0_i32_0 = arith.constant 0 : i32
    %c0_i32_1 = arith.constant 0 : i32
    return %c0_i32, %c0_i32_0 : i32, i32
  }
  func.func @transform_3(%arg0: i32) -> (i32, i32) {
    %c0_i32 = arith.constant 0 : i32
    %c0_i32_0 = arith.constant 0 : i32
    %c0_i32_1 = arith.constant 0 : i32
    return %c0_i32, %c0_i32_0 : i32, i32
  }
  func.func @transform_4(%arg0: i32) -> (i32, i32) {
    %c0_i32 = arith.constant 0 : i32
    %c0_i32_0 = arith.constant 0 : i32
    %c0_i32_1 = arith.constant 0 : i32
    return %c0_i32, %c0_i32_0 : i32, i32
  }
  func.func @transform_5(%arg0: i32) -> (i32, i32) {
    %c0_i32 = arith.constant 0 : i32
    %c0_i32_0 = arith.constant 0 : i32
    %c0_i32_1 = arith.constant 0 : i32
    return %c0_i32, %c0_i32_0 : i32, i32
  }
  func.func @transform_6(%arg0: i32) -> (i32, i32) {
    %c0_i32 = arith.constant 0 : i32
    %c0_i32_0 = arith.constant 0 : i32
    %c0_i32_1 = arith.constant 0 : i32
    return %c0_i32, %c0_i32_0 : i32, i32
  }
}

</mosaic_0001>

<llo_original>
// kernel: tpu_custom_call.1
$region0: #{tpu_custom_call.1}
  #allocation0 [shape = 'u32[]', space=smem, size = 0x4, offset = 0x4, fixed_abs, tag = 'smem constant byte address 0x4 - core index']
  #allocation1 [shape = 'u32[72,128]{1,0:T(1,128)}', space=vmem, size = 0x9000, scoped, tag = 'internal scratch']
  #allocation2 [shape = 'f32[1]{0:T(128)S(6)}', space=smem, size = 0x200, scoped, tag = 'scoped memory for tpu_custom_call.1']
  %s0 = inlined_call_operand.<no memory space> [shape: f32[1], index: 0, kind: input, shape index: {}]
  %s1 = inlined_call_operand.vmem [shape: f32[10,256], index: 1, kind: input, shape index: {}]
  %s2 = inlined_call_operand.vmem [shape: f32[8,256], index: 2, kind: input, shape index: {}]
  %s3 = inlined_call_operand.vmem [shape: f32[128,10], index: 3, kind: input, shape index: {}]
  %s4 = inlined_call_operand.vmem [shape: f32[8,64], index: 4, kind: input, shape index: {}]
  %s5 = inlined_call_operand.vmem [shape: f32[8,256], index: 5, kind: input, shape index: {}]
  %s6 = inlined_call_operand.hbm [shape: f32[8,256], index: 6, kind: output, shape index: {}]
  %s7 = sld [smem:[#allocation0]]
  $region34: #{tpu_custom_call.1} parent=0
    _
  %s9 = ssub.s32 1, %s7
  %s10 = scalar_select 0, %s9, %s7
  %11 = sst [smem:[#allocation2]] %s0
  $region1: #{tpu_custom_call.1} parent=0
    #allocation3 [shape = 'u8[8192]{0}', space=vmem, size = 0x2000, scoped, tag = 'output window, operand 0, single buffered']
    #allocation4 [shape = 's32[1]{0}', space=sflag, size = 0x4, scoped, tag = 'scoped memory for tpu_custom_call.1']
    %12 = vsyncpa [#allocation4], 0
    // Predicated region
    $region2: #{tpu_custom_call.1} parent=1 // pred_check
      _
    $region3: #{tpu_custom_call.1} parent=1 // pred_check_branch
      %14 = sbr.rel (0) target = $region5
    $region4: #{tpu_custom_call.1} parent=1 // pred_region
      _
    $region5: #{tpu_custom_call.1} parent=1 // pred_fallthru
      _
    // Predicated region
    $region6: #{tpu_custom_call.1} parent=1 // pred_check
      _
    $region7: #{tpu_custom_call.1} parent=1 // pred_check_branch
      %16 = sbr.rel (0) target = $region9
    $region8: #{tpu_custom_call.1} parent=1 // pred_region
      _
    $region9: #{tpu_custom_call.1} parent=1 // pred_fallthru
      _
    // Predicated region
    $region10: #{tpu_custom_call.1} parent=1 // pred_check
      _
    $region11: #{tpu_custom_call.1} parent=1 // pred_check_branch
      %18 = sbr.rel (0) target = $region13
    $region12: #{tpu_custom_call.1} parent=1 // pred_region
      _
    $region13: #{tpu_custom_call.1} parent=1 // pred_fallthru
      _
    // Predicated region
    $region14: #{tpu_custom_call.1} parent=1 // pred_check
      _
    $region15: #{tpu_custom_call.1} parent=1 // pred_check_branch
      %20 = sbr.rel (0) target = $region17
    $region16: #{tpu_custom_call.1} parent=1 // pred_region
      _
    $region17: #{tpu_custom_call.1} parent=1 // pred_fallthru
      _
    // Predicated region
    $region18: #{tpu_custom_call.1} parent=1 // pred_check
      _
    $region19: #{tpu_custom_call.1} parent=1 // pred_check_branch
      %22 = sbr.rel (0) target = $region21
    $region20: #{tpu_custom_call.1} parent=1 // pred_region
      _
    $region21: #{tpu_custom_call.1} parent=1 // pred_fallthru
      _
    // Predicated region
    $region22: #{tpu_custom_call.1} parent=1 // pred_check
      _
    $region23: #{tpu_custom_call.1} parent=1 // pred_check_branch
      %24 = sbr.rel (0) target = $region25
    $region24: #{tpu_custom_call.1} parent=1 // pred_region
      _
    $region25: #{tpu_custom_call.1} parent=1 // pred_fallthru
      _
    %s25 = sld [smem:[#allocation2]]
    %v26 = vld [vmem:[%s3] sm:$0xff]
    %v27 = vld [vmem:[%s3 + $0x8] sm:$0xff]
    %v28 = vld [vmem:[%s3 + $0x10] sm:$0xff]
    %v29 = vld [vmem:[%s3 + $0x18] sm:$0xff]
    %v30 = vld [vmem:[%s3 + $0x20] sm:$0xff]
    %v31 = vld [vmem:[%s3 + $0x28] sm:$0xff]
    %v32 = vld [vmem:[%s3 + $0x30] sm:$0xff]
    %v33 = vld [vmem:[%s3 + $0x38] sm:$0xff]
    %v34 = vld [vmem:[%s3 + $0x40] sm:$0xff]
    %v35 = vld [vmem:[%s3 + $0x48] sm:$0xff]
    %v36 = vld [vmem:[%s3 + $0x50] sm:$0xff]
    %v37 = vld [vmem:[%s3 + $0x58] sm:$0xff]
    %v38 = vld [vmem:[%s3 + $0x60] sm:$0xff]
    %v39 = vld [vmem:[%s3 + $0x68] sm:$0xff]
    %v40 = vld [vmem:[%s3 + $0x70] sm:$0xff]
    %v41 = vld [vmem:[%s3 + $0x78] sm:$0xff]
    %v42 = vld [vmem:[%s1] sm:$0xff]
    %v43 = vld [vmem:[%s1 + $0x8] sm:$0xff]
    %v44 = vld [vmem:[%s1 + $0x10] sm:$0x3]
    %v45 = vld [vmem:[%s1 + $0x18] sm:$0x3]
    %vm46 = vcmask 80896
    %v48 = vsel %vm46, %v26, 0
    %v51 = vsel %vm46, %v27, 0
    %v54 = vsel %vm46, %v28, 0
    %v57 = vsel %vm46, %v29, 0
    %v60 = vsel %vm46, %v30, 0
    %v63 = vsel %vm46, %v31, 0
    %v66 = vsel %vm46, %v32, 0
    %v69 = vsel %vm46, %v33, 0
    %v72 = vsel %vm46, %v34, 0
    %v75 = vsel %vm46, %v35, 0
    %v78 = vsel %vm46, %v36, 0
    %v81 = vsel %vm46, %v37, 0
    %v84 = vsel %vm46, %v38, 0
    %v87 = vsel %vm46, %v39, 0
    %v90 = vsel %vm46, %v40, 0
    %v93 = vsel %vm46, %v41, 0
    %vm95 = vcmask 1041408
    %v97 = vsel %vm95, %v44, 0
    %v100 = vsel %vm95, %v45, 0
    %102 = vmatpush.msra.mxu0 0.0
    %103 = vmatpush.msra.mxu0 0.0
    %104 = vmatpush.msra.mxu0 0.0
    %105 = vmatpush.msra.mxu0 0.0
    %106 = vmatpush.msra.mxu0 0.0
    %107 = vmatpush.msra.mxu0 0.0
    %108 = vmatpush.msra.mxu0 0.0
    %109 = vmatpush.msra.mxu0 0.0
    %110 = vmatpush.msra.mxu0 0.0
    %111 = vmatpush.msra.mxu0 0.0
    %112 = vmatpush.msra.mxu0 0.0
    %113 = vmatpush.msra.mxu0 0.0
    %114 = vmatpush.msra.mxu0 0.0
    %115 = vmatpush.msra.mxu0 0.0
    %116 = vmatpush.msra.mxu0 %v97
    %117 = vmatpush.msra.mxu0 %v42
    %118 = vmatmul.f32.gmra.mxu0 %v48
    %v119 = vpop.f32.mrf.mxu0
    %v120 = vadd.f32 0.0, %v119
    %121 = vmatmul.f32.gmra.mxu0 %v51
    %v122 = vpop.f32.mrf.mxu0
    %v123 = vadd.f32 0.0, %v122
    %124 = vmatmul.f32.gmra.mxu0 %v54
    %v125 = vpop.f32.mrf.mxu0
    %v126 = vadd.f32 0.0, %v125
    %127 = vmatmul.f32.gmra.mxu0 %v57
    %v128 = vpop.f32.mrf.mxu0
    %v129 = vadd.f32 0.0, %v128
    %130 = vmatmul.f32.gmra.mxu0 %v60
    %v131 = vpop.f32.mrf.mxu0
    %v132 = vadd.f32 0.0, %v131
    %133 = vmatmul.f32.gmra.mxu0 %v63
    %v134 = vpop.f32.mrf.mxu0
    %v135 = vadd.f32 0.0, %v134
    %136 = vmatmul.f32.gmra.mxu0 %v66
    %v137 = vpop.f32.mrf.mxu0
    %v138 = vadd.f32 0.0, %v137
    %139 = vmatmul.f32.gmra.mxu0 %v69
    %v140 = vpop.f32.mrf.mxu0
    %v141 = vadd.f32 0.0, %v140
    %142 = vmatmul.f32.gmra.mxu0 %v72
    %v143 = vpop.f32.mrf.mxu0
    %v144 = vadd.f32 0.0, %v143
    %145 = vmatmul.f32.gmra.mxu0 %v75
    %v146 = vpop.f32.mrf.mxu0
    %v147 = vadd.f32 0.0, %v146
    %148 = vmatmul.f32.gmra.mxu0 %v78
    %v149 = vpop.f32.mrf.mxu0
    %v150 = vadd.f32 0.0, %v149
    %151 = vmatmul.f32.gmra.mxu0 %v81
    %v152 = vpop.f32.mrf.mxu0
    %v153 = vadd.f32 0.0, %v152
    %154 = vmatmul.f32.gmra.mxu0 %v84
    %v155 = vpop.f32.mrf.mxu0
    %v156 = vadd.f32 0.0, %v155
    %157 = vmatmul.f32.gmra.mxu0 %v87
    %v158 = vpop.f32.mrf.mxu0
    %v159 = vadd.f32 0.0, %v158
    %160 = vmatmul.f32.gmra.mxu0 %v90
    %v161 = vpop.f32.mrf.mxu0
    %v162 = vadd.f32 0.0, %v161
    %163 = vmatmul.f32.gmra.mxu0 %v93
    %v164 = vpop.f32.mrf.mxu0
    %v165 = vadd.f32 0.0, %v164
    %166 = vdwg.mxu0
    %167 = vmatpush.msra.mxu0 0.0
    %168 = vmatpush.msra.mxu0 0.0
    %169 = vmatpush.msra.mxu0 0.0
    %170 = vmatpush.msra.mxu0 0.0
    %171 = vmatpush.msra.mxu0 0.0
    %172 = vmatpush.msra.mxu0 0.0
    %173 = vmatpush.msra.mxu0 0.0
    %174 = vmatpush.msra.mxu0 0.0
    %175 = vmatpush.msra.mxu0 0.0
    %176 = vmatpush.msra.mxu0 0.0
    %177 = vmatpush.msra.mxu0 0.0
    %178 = vmatpush.msra.mxu0 0.0
    %179 = vmatpush.msra.mxu0 0.0
    %180 = vmatpush.msra.mxu0 0.0
    %181 = vmatpush.msra.mxu0 %v100
    %182 = vmatpush.msra.mxu0 %v43
    %183 = vmatmul.f32.gmra.mxu0 %v48
    %v184 = vpop.f32.mrf.mxu0
    %v185 = vadd.f32 0.0, %v184
    %186 = vmatmul.f32.gmra.mxu0 %v51
    %v187 = vpop.f32.mrf.mxu0
    %v188 = vadd.f32 0.0, %v187
    %189 = vmatmul.f32.gmra.mxu0 %v54
    %v190 = vpop.f32.mrf.mxu0
    %v191 = vadd.f32 0.0, %v190
    %192 = vmatmul.f32.gmra.mxu0 %v57
    %v193 = vpop.f32.mrf.mxu0
    %v194 = vadd.f32 0.0, %v193
    %195 = vmatmul.f32.gmra.mxu0 %v60
    %v196 = vpop.f32.mrf.mxu0
    %v197 = vadd.f32 0.0, %v196
    %198 = vmatmul.f32.gmra.mxu0 %v63
    %v199 = vpop.f32.mrf.mxu0
    %v200 = vadd.f32 0.0, %v199
    %201 = vmatmul.f32.gmra.mxu0 %v66
    %v202 = vpop.f32.mrf.mxu0
    %v203 = vadd.f32 0.0, %v202
    %204 = vmatmul.f32.gmra.mxu0 %v69
    %v205 = vpop.f32.mrf.mxu0
    %v206 = vadd.f32 0.0, %v205
    %207 = vmatmul.f32.gmra.mxu0 %v72
    %v208 = vpop.f32.mrf.mxu0
    %v209 = vadd.f32 0.0, %v208
    %210 = vmatmul.f32.gmra.mxu0 %v75
    %v211 = vpop.f32.mrf.mxu0
    %v212 = vadd.f32 0.0, %v211
    %213 = vmatmul.f32.gmra.mxu0 %v78
    %v214 = vpop.f32.mrf.mxu0
    %v215 = vadd.f32 0.0, %v214
    %216 = vmatmul.f32.gmra.mxu0 %v81
    %v217 = vpop.f32.mrf.mxu0
    %v218 = vadd.f32 0.0, %v217
    %219 = vmatmul.f32.gmra.mxu0 %v84
    %v220 = vpop.f32.mrf.mxu0
    %v221 = vadd.f32 0.0, %v220
    %222 = vmatmul.f32.gmra.mxu0 %v87
    %v223 = vpop.f32.mrf.mxu0
    %v224 = vadd.f32 0.0, %v223
    %225 = vmatmul.f32.gmra.mxu0 %v90
    %v226 = vpop.f32.mrf.mxu0
    %v227 = vadd.f32 0.0, %v226
    %228 = vmatmul.f32.gmra.mxu0 %v93
    %v229 = vpop.f32.mrf.mxu0
    %v230 = vadd.f32 0.0, %v229
    %231 = vdwg.mxu0
    %v232 = vtanh.pop %v120
    %v233 = vtanh.pop %v185
    %v234 = vtanh.pop %v123
    %v235 = vtanh.pop %v188
    %v236 = vtanh.pop %v126
    %v237 = vtanh.pop %v191
    %v238 = vtanh.pop %v129
    %v239 = vtanh.pop %v194
    %v240 = vtanh.pop %v132
    %v241 = vtanh.pop %v197
    %v242 = vtanh.pop %v135
    %v243 = vtanh.pop %v200
    %v244 = vtanh.pop %v138
    %v245 = vtanh.pop %v203
    %v246 = vtanh.pop %v141
    %v247 = vtanh.pop %v206
    %v248 = vtanh.pop %v144
    %v249 = vtanh.pop %v209
    %v250 = vtanh.pop %v147
    %v251 = vtanh.pop %v212
    %v252 = vtanh.pop %v150
    %v253 = vtanh.pop %v215
    %v254 = vtanh.pop %v153
    %v255 = vtanh.pop %v218
    %v256 = vtanh.pop %v156
    %v257 = vtanh.pop %v221
    %v258 = vtanh.pop %v159
    %v259 = vtanh.pop %v224
    %v260 = vtanh.pop %v162
    %v261 = vtanh.pop %v227
    %v262 = vtanh.pop %v165
    %v263 = vtanh.pop %v230
    %v264 = vsub.f32 %v248, %v232
    %v265 = vsub.f32 %v249, %v233
    %v266 = vsub.f32 %v250, %v234
    %v267 = vsub.f32 %v251, %v235
    %v268 = vsub.f32 %v252, %v236
    %v269 = vsub.f32 %v253, %v237
    %v270 = vsub.f32 %v254, %v238
    %v271 = vsub.f32 %v255, %v239
    %v272 = vsub.f32 %v256, %v240
    %v273 = vsub.f32 %v257, %v241
    %v274 = vsub.f32 %v258, %v242
    %v275 = vsub.f32 %v259, %v243
    %v276 = vsub.f32 %v260, %v244
    %v277 = vsub.f32 %v261, %v245
    %v278 = vsub.f32 %v262, %v246
    %v279 = vsub.f32 %v263, %v247
    %v280 = vstv %s25
    %v281 = vmul.f32 %v264, %v280
    %v282 = vmul.f32 %v265, %v280
    %v283 = vmul.f32 %v266, %v280
    %v284 = vmul.f32 %v267, %v280
    %v285 = vmul.f32 %v268, %v280
    %v286 = vmul.f32 %v269, %v280
    %v287 = vmul.f32 %v270, %v280
    %v288 = vmul.f32 %v271, %v280
    %v289 = vmul.f32 %v272, %v280
    %v290 = vmul.f32 %v273, %v280
    %v291 = vmul.f32 %v274, %v280
    %v292 = vmul.f32 %v275, %v280
    %v293 = vmul.f32 %v276, %v280
    %v294 = vmul.f32 %v277, %v280
    %v295 = vmul.f32 %v278, %v280
    %v296 = vmul.f32 %v279, %v280
    %v297 = vadd.f32 %v232, %v281
    %v298 = vadd.f32 %v233, %v282
    %v299 = vadd.f32 %v234, %v283
    %v300 = vadd.f32 %v235, %v284
    %v301 = vadd.f32 %v236, %v285
    %v302 = vadd.f32 %v237, %v286
    %v303 = vadd.f32 %v238, %v287
    %v304 = vadd.f32 %v239, %v288
    %v305 = vadd.f32 %v240, %v289
    %v306 = vadd.f32 %v241, %v290
    %v307 = vadd.f32 %v242, %v291
    %v308 = vadd.f32 %v243, %v292
    %v309 = vadd.f32 %v244, %v293
    %v310 = vadd.f32 %v245, %v294
    %v311 = vadd.f32 %v246, %v295
    %v312 = vadd.f32 %v247, %v296
    %v313 = vld [vmem:[%s4] sm:$0xff]
    %v314 = vld [vmem:[%s5] sm:$0xff]
    %v315 = vld [vmem:[%s5 + $0x8] sm:$0xff]
    %vm316 = vcmask 523264
    %v318 = vsel %vm316, %v313, 0
    %320 = vmatpush.msra.mxu0 0.0
    %321 = vmatpush.msra.mxu0 0.0
    %322 = vmatpush.msra.mxu0 0.0
    %323 = vmatpush.msra.mxu0 0.0
    %324 = vmatpush.msra.mxu0 0.0
    %325 = vmatpush.msra.mxu0 0.0
    %326 = vmatpush.msra.mxu0 0.0
    %327 = vmatpush.msra.mxu0 0.0
    %328 = vmatpush.msra.mxu0 %v311
    %329 = vmatpush.msra.mxu0 %v309
    %330 = vmatpush.msra.mxu0 %v307
    %331 = vmatpush.msra.mxu0 %v305
    %332 = vmatpush.msra.mxu0 %v303
    %333 = vmatpush.msra.mxu0 %v301
    %334 = vmatpush.msra.mxu0 %v299
    %335 = vmatpush.msra.mxu0 %v297
    %336 = vmatmul.f32.gmra.mxu0 %v318
    %v337 = vpop.f32.mrf.mxu0
    %v338 = vadd.f32 %v314, %v337
    %339 = vdwg.mxu0
    %340 = vmatpush.msra.mxu0 0.0
    %341 = vmatpush.msra.mxu0 0.0
    %342 = vmatpush.msra.mxu0 0.0
    %343 = vmatpush.msra.mxu0 0.0
    %344 = vmatpush.msra.mxu0 0.0
    %345 = vmatpush.msra.mxu0 0.0
    %346 = vmatpush.msra.mxu0 0.0
    %347 = vmatpush.msra.mxu0 0.0
    %348 = vmatpush.msra.mxu0 %v312
    %349 = vmatpush.msra.mxu0 %v310
    %350 = vmatpush.msra.mxu0 %v308
    %351 = vmatpush.msra.mxu0 %v306
    %352 = vmatpush.msra.mxu0 %v304
    %353 = vmatpush.msra.mxu0 %v302
    %354 = vmatpush.msra.mxu0 %v300
    %355 = vmatpush.msra.mxu0 %v298
    %356 = vmatmul.f32.gmra.mxu0 %v318
    %v357 = vpop.f32.mrf.mxu0
    %v358 = vadd.f32 %v315, %v357
    %359 = vdwg.mxu0
    %v360 = vld [vmem:[%s2] sm:$0xff]
    %v361 = vld [vmem:[%s2 + $0x8] sm:$0xff]
    %v362 = vadd.f32 %v338, %v360
    %v363 = vadd.f32 %v358, %v361
    %364 = vst [vmem:[#allocation3] sm:$0xff] %v362
    %365 = vst [vmem:[#allocation3 + $0x8] sm:$0xff] %v363
    // Predicated region
    $region26: #{tpu_custom_call.1} parent=1 // pred_check
      _
    $region27: #{tpu_custom_call.1} parent=1 // pred_check_branch
      %367 = sbr.rel (0) target = $region29
    $region28: #{tpu_custom_call.1} parent=1 // pred_region
      %369 = vsyncadd [#allocation4], 0
      %s371 = sshll.u32 [#allocation3], 4
      %s372 = int_to_ptr.vmem [resolvable:$true] %s371
      %s373 = sshll.u32 %s6, 4
      %s374 = int_to_ptr.hbm [resolvable:$true] %s373
      %376 = dma.vmem_to_hbm [thread:$0]  %s372, 256, %s374, [#allocation4]
    $region29: #{tpu_custom_call.1} parent=1 // pred_fallthru
      _
    // Predicated region
    $region30: #{tpu_custom_call.1} parent=1 // pred_check
      _
    $region31: #{tpu_custom_call.1} parent=1 // pred_check_branch
      %378 = sbr.rel (0) target = $region33
    $region32: #{tpu_custom_call.1} parent=1 // pred_region
      %380 = dma.done [#allocation4], 256
    $region33: #{tpu_custom_call.1} parent=1 // pred_fallthru
      _
    %381 = vsyncpa [#allocation4], 1

</llo_original>
